<compile_context>
chip_gen: v7x
topology: tpu7x:2x2x1
jax: 0.10.0
libtpu: 0.0.40
codegen_flags: <defaults>
</compile_context>

<pallas_src>
import jax
import jax.numpy as jnp
from jax.experimental import pallas as pl
from jax.experimental.pallas import tpu as pltpu


def _seg_loss_kernel(logits_ref, tgt_ref,
                     ce_ref, inter_ref, pred_ref, tsum_ref,
                     acc_ce, acc_inter, acc_pred, acc_tgt):
    t = pl.program_id(1)

    @pl.when(t == 0)
    def _init():
        acc_ce[...] = jnp.zeros_like(acc_ce)
        acc_inter[...] = jnp.zeros_like(acc_inter)
        acc_pred[...] = jnp.zeros_like(acc_pred)
        acc_tgt[...] = jnp.zeros_like(acc_tgt)

    x = logits_ref[0].astype(jnp.float32)            # (C, TR, 128)
    tgt = tgt_ref[0]                                 # (TR, 128) int32, -1 = pad

    # Numerically-stable softmax / log-softmax over the class axis.
    # Class axis is a non-tiled leading dim -> pure VALU/EUP work.
    m = jnp.max(x, axis=0, keepdims=True)            # (1, TR, 128)
    e = jnp.exp(x - m)                               # (C, TR, 128)
    s = jnp.sum(e, axis=0, keepdims=True)            # (1, TR, 128)
    logp = (x - m) - jnp.log(s)                      # (C, TR, 128)
    probs = e / s                                    # (C, TR, 128)

    cls = jax.lax.broadcasted_iota(jnp.int32, x.shape, 0)
    one_hot = (cls == tgt[None]).astype(jnp.float32)   # 0 at padded pixels
    valid = (tgt >= 0).astype(jnp.float32)[None]        # (1, TR, 128)

    # Per-class partial sums over this spatial tile (lanes kept -> unmasked).
    acc_ce[...]    += jnp.sum(one_hot * (-logp), axis=1, keepdims=True)
    acc_inter[...] += jnp.sum(one_hot * probs,   axis=1, keepdims=True)
    acc_pred[...]  += jnp.sum(probs * valid,     axis=1, keepdims=True)
    acc_tgt[...]   += jnp.sum(one_hot,           axis=1, keepdims=True)

    @pl.when(t == pl.num_programs(1) - 1)
    def _write():
        ce_ref[0] = acc_ce[...]
        inter_ref[0] = acc_inter[...]
        pred_ref[0] = acc_pred[...]
        tsum_ref[0] = acc_tgt[...]


def _pick_tile_rows(num_classes, rows, itemsize):
    # Keep the double-buffered logits tile (2 * C * TR * 128 * itemsize) at
    # ~6 MiB max so the full working set fits v5e's 16 MiB default scoped
    # VMEM and leaves plenty of headroom on v6e/v7x.
    budget_bytes = 3 * 1024 * 1024
    tr = budget_bytes // max(1, num_classes * 128 * itemsize)
    tr = max(8, (tr // 8) * 8)
    tr = min(tr, 512)
    if rows <= tr:
        return rows          # single full-extent tile (no (8,128) issue)
    return tr


def _segmentation_loss_pallas(logits, masks, *, lambda_ce, lambda_dice,
                              class_weights, smooth):
    # logits: (N, C, H, W) float; masks: (N, H, W) int
    N, C, H, W = logits.shape
    HW = H * W

    x = logits.reshape(N, C, HW)
    t = masks.astype(jnp.int32).reshape(N, HW)

    rows = pl.cdiv(HW, 128)
    itemsize = jnp.dtype(logits.dtype).itemsize
    tr = _pick_tile_rows(C, rows, itemsize)
    n_tiles = pl.cdiv(rows, tr)
    rows_pad = n_tiles * tr
    total_pix = rows_pad * 128

    if total_pix != HW:
        x = jnp.pad(x, ((0, 0), (0, 0), (0, total_pix - HW)))
        t = jnp.pad(t, ((0, 0), (0, total_pix - HW)), constant_values=-1)
    x = x.reshape(N, C, rows_pad, 128)   # stream in input dtype, upcast in-kernel
    t = t.reshape(N, rows_pad, 128)

    part_shape = jax.ShapeDtypeStruct((N, C, 1, 128), jnp.float32)
    part_spec = pl.BlockSpec((1, C, 1, 128), lambda n, s: (n, 0, 0, 0))

    cost = pl.CostEstimate(
        flops=int(16 * N * C * total_pix),
        transcendentals=int(N * C * total_pix + N * total_pix),
        bytes_accessed=int(x.size * itemsize + t.size * 4 + 4 * N * C * 128 * 4),
    )

    ce_p, inter_p, pred_p, tgt_p = pl.pallas_call(
        _seg_loss_kernel,
        out_shape=(part_shape,) * 4,
        grid_spec=pltpu.PrefetchScalarGridSpec(
            num_scalar_prefetch=0,
            grid=(N, n_tiles),
            in_specs=[
                pl.BlockSpec((1, C, tr, 128), lambda n, s: (n, 0, s, 0)),
                pl.BlockSpec((1, tr, 128), lambda n, s: (n, s, 0)),
            ],
            out_specs=(part_spec,) * 4,
            scratch_shapes=[pltpu.VMEM((C, 1, 128), jnp.float32)] * 4,
        ),
        compiler_params=pltpu.CompilerParams(
            dimension_semantics=("parallel", "arbitrary")),
        cost_estimate=cost,
    )(x, t)

    # Tiny finalization on ~N*C scalars in plain JAX.
    if class_weights is None:
        w = jnp.ones((C,), jnp.float32)
    else:
        w = jnp.asarray(class_weights, jnp.float32).reshape(C)

    ce_per_class = jnp.sum(ce_p, axis=(0, 2, 3))                 # (C,)
    ce_loss = jnp.sum(w * ce_per_class) / float(N * HW)          # matches CE('none').mean()

    inter = jnp.sum(inter_p, axis=(2, 3))                        # (N, C)
    union = jnp.sum(pred_p, axis=(2, 3)) + jnp.sum(tgt_p, axis=(2, 3))
    dice = (2.0 * inter + smooth) / (union + smooth)
    dice_loss = 1.0 - jnp.mean(dice)

    loss = lambda_ce * ce_loss + lambda_dice * dice_loss
    return {'loss': loss, 'ce_loss': ce_loss, 'dice_loss': dice_loss}


def segmentation_loss(predictions, targets, *, lambda_ce=1.0, lambda_dice=1.0,
                      class_weights=None, smooth=1.0):
    """JAX/Pallas equivalent of SegmentationLoss.forward."""
    if 'segmentation' not in predictions:
        z = jnp.zeros((), jnp.float32)
        return {'loss': z, 'ce_loss': z, 'dice_loss': z}
    pred_masks = predictions['segmentation']
    B, T, C, H, W = pred_masks.shape
    logits = pred_masks.reshape(B * T, C, H, W)
    masks = targets['masks'].reshape(B * T, H, W)
    return _segmentation_loss_pallas(
        logits, masks, lambda_ce=lambda_ce, lambda_dice=lambda_dice,
        class_weights=class_weights, smooth=smooth)


def _reference(predictions, targets, lambda_ce=1.0, lambda_dice=1.0,
               class_weights=None, smooth=1.0):
    pred = predictions['segmentation']
    B, T, C, H, W = pred.shape
    p = pred.reshape(B * T, C, H, W).astype(jnp.float32)
    t = targets['masks'].reshape(B * T, H, W)
    logp = jax.nn.log_softmax(p, axis=1)
    oh = jax.nn.one_hot(t, C, axis=1, dtype=jnp.float32)     # (N, C, H, W)
    w = (jnp.ones((C,), jnp.float32) if class_weights is None
         else jnp.asarray(class_weights, jnp.float32))
    ce_pix = -jnp.sum(oh * logp * w[None, :, None, None], axis=1)
    ce_loss = jnp.mean(ce_pix)
    probs = jax.nn.softmax(p, axis=1)
    inter = jnp.sum(probs * oh, axis=(2, 3))
    union = jnp.sum(probs, axis=(2, 3)) + jnp.sum(oh, axis=(2, 3))
    dice = (2.0 * inter + smooth) / (union + smooth)
    dice_loss = 1.0 - jnp.mean(dice)
    loss = lambda_ce * ce_loss + lambda_dice * dice_loss
    return {'loss': loss, 'ce_loss': ce_loss, 'dice_loss': dice_loss}


if __name__ == "__main__":
    key = jax.random.PRNGKey(0)
    k1, k2, k3, k4 = jax.random.split(key, 4)

    # Case 1: B=2, T=2, C=4, H=W=16 (HW multiple of 128, multi-sample grid).
    B, T, C, H, W = 2, 2, 4, 16, 16
    preds = {'segmentation': jax.random.normal(k1, (B, T, C, H, W), jnp.float32)}
    tgts = {'masks': jax.random.randint(k2, (B, T, H, W), 0, C)}

    out = segmentation_loss(preds, tgts)
    out = jax.tree_util.tree_map(jax.block_until_ready, out)
    ref = _reference(preds, tgts)
    for name in ('loss', 'ce_loss', 'dice_loss'):
        assert jnp.allclose(out[name], ref[name], rtol=1e-4, atol=1e-5), (
            name, out[name], ref[name])

    # Case 2: exercises spatial padding / -1 target masking (HW=100 not a
    # multiple of 128) and the optional class-weight path.
    B2, T2, C2, H2, W2 = 2, 1, 3, 10, 10
    preds2 = {'segmentation': jax.random.normal(k3, (B2, T2, C2, H2, W2),
                                                jnp.float32)}
    tgts2 = {'masks': jax.random.randint(k4, (B2, T2, H2, W2), 0, C2)}
    cw = jnp.array([0.5, 1.0, 2.0], jnp.float32)

    out2 = segmentation_loss(preds2, tgts2, lambda_ce=0.7, lambda_dice=1.3,
                             class_weights=cw)
    out2 = jax.tree_util.tree_map(jax.block_until_ready, out2)
    ref2 = _reference(preds2, tgts2, lambda_ce=0.7, lambda_dice=1.3,
                      class_weights=cw)
    for name in ('loss', 'ce_loss', 'dice_loss'):
        assert jnp.allclose(out2[name], ref2[name], rtol=1e-4, atol=1e-5), (
            name, out2[name], ref2[name])

    print("KERNEL_OK")
</pallas_src>

<mosaic_0001>
module attributes {stable_mosaic.version = 11 : i64} {
  func.func @_seg_loss_kernel(%arg0: i32, %arg1: i32, %arg2: memref<1x4x2x128xf32, #tpu.memory_space<vmem>>, %arg3: memref<1x2x128xi32, #tpu.memory_space<vmem>>, %arg4: memref<1x4x1x128xf32, #tpu.memory_space<vmem>>, %arg5: memref<1x4x1x128xf32, #tpu.memory_space<vmem>>, %arg6: memref<1x4x1x128xf32, #tpu.memory_space<vmem>>, %arg7: memref<1x4x1x128xf32, #tpu.memory_space<vmem>>, %arg8: memref<4x1x128xf32, #tpu.memory_space<vmem>>, %arg9: memref<4x1x128xf32, #tpu.memory_space<vmem>>, %arg10: memref<4x1x128xf32, #tpu.memory_space<vmem>>, %arg11: memref<4x1x128xf32, #tpu.memory_space<vmem>>) attributes {dimension_semantics = [#tpu.dimension_semantics<parallel>, #tpu.dimension_semantics<arbitrary>], iteration_bounds = array<i64: 4, 1>, scalar_prefetch = 0 : i64, scratch_operands = 4 : i64, tpu.core_type = #tpu.core_type<tc>, window_params = [{transform_indices = @transform_0, window_bounds = array<i64: 1, 4, 2, 128>}, {transform_indices = @transform_1, window_bounds = array<i64: 1, 2, 128>}, {transform_indices = @transform_2, window_bounds = array<i64: 1, 4, 1, 128>}, {transform_indices = @transform_3, window_bounds = array<i64: 1, 4, 1, 128>}, {transform_indices = @transform_4, window_bounds = array<i64: 1, 4, 1, 128>}, {transform_indices = @transform_5, window_bounds = array<i64: 1, 4, 1, 128>}]} {
    %c0_i32 = arith.constant 0 : i32
    %0 = arith.cmpi eq, %arg1, %c0_i32 : i32
    %1 = arith.extui %0 : i1 to i32
    %c0_i32_0 = arith.constant 0 : i32
    %2 = arith.cmpi ne, %1, %c0_i32_0 : i32
    scf.if %2 {
      %cst_40 = arith.constant 0.000000e+00 : f32
      %61 = vector.broadcast %cst_40 : f32 to vector<4x1x128xf32>
      %c0_41 = arith.constant 0 : index
      %c0_42 = arith.constant 0 : index
      %c0_43 = arith.constant 0 : index
      %62 = vector.load %arg8[%c0_41, %c0_42, %c0_43] : memref<4x1x128xf32, #tpu.memory_space<vmem>>, vector<4x1x128xf32>
      tpu.vector_store %arg8[%c0_41, %c0_42, %c0_43], %61 {strides = array<i32>} : memref<4x1x128xf32, #tpu.memory_space<vmem>>, vector<4x1x128xf32>,
      %cst_44 = arith.constant 0.000000e+00 : f32
      %63 = vector.broadcast %cst_44 : f32 to vector<4x1x128xf32>
      %c0_45 = arith.constant 0 : index
      %c0_46 = arith.constant 0 : index
      %c0_47 = arith.constant 0 : index
      %64 = vector.load %arg9[%c0_45, %c0_46, %c0_47] : memref<4x1x128xf32, #tpu.memory_space<vmem>>, vector<4x1x128xf32>
      tpu.vector_store %arg9[%c0_45, %c0_46, %c0_47], %63 {strides = array<i32>} : memref<4x1x128xf32, #tpu.memory_space<vmem>>, vector<4x1x128xf32>,
      %cst_48 = arith.constant 0.000000e+00 : f32
      %65 = vector.broadcast %cst_48 : f32 to vector<4x1x128xf32>
      %c0_49 = arith.constant 0 : index
      %c0_50 = arith.constant 0 : index
      %c0_51 = arith.constant 0 : index
      %66 = vector.load %arg10[%c0_49, %c0_50, %c0_51] : memref<4x1x128xf32, #tpu.memory_space<vmem>>, vector<4x1x128xf32>
      tpu.vector_store %arg10[%c0_49, %c0_50, %c0_51], %65 {strides = array<i32>} : memref<4x1x128xf32, #tpu.memory_space<vmem>>, vector<4x1x128xf32>,
      %cst_52 = arith.constant 0.000000e+00 : f32
      %67 = vector.broadcast %cst_52 : f32 to vector<4x1x128xf32>
      %c0_53 = arith.constant 0 : index
      %c0_54 = arith.constant 0 : index
      %c0_55 = arith.constant 0 : index
      %68 = vector.load %arg11[%c0_53, %c0_54, %c0_55] : memref<4x1x128xf32, #tpu.memory_space<vmem>>, vector<4x1x128xf32>
      tpu.vector_store %arg11[%c0_53, %c0_54, %c0_55], %67 {strides = array<i32>} : memref<4x1x128xf32, #tpu.memory_space<vmem>>, vector<4x1x128xf32>,
    } else {
    }
    %c0 = arith.constant 0 : index
    %c0_1 = arith.constant 0 : index
    %c0_2 = arith.constant 0 : index
    %c0_3 = arith.constant 0 : index
    %3 = vector.load %arg2[%c0, %c0_1, %c0_2, %c0_3] : memref<1x4x2x128xf32, #tpu.memory_space<vmem>>, vector<1x4x2x128xf32>
    %4 = vector.shape_cast %3 : vector<1x4x2x128xf32> to vector<4x2x128xf32>
    %c0_4 = arith.constant 0 : index
    %c0_5 = arith.constant 0 : index
    %c0_6 = arith.constant 0 : index
    %5 = vector.load %arg3[%c0_4, %c0_5, %c0_6] : memref<1x2x128xi32, #tpu.memory_space<vmem>>, vector<1x2x128xi32>
    %6 = vector.shape_cast %5 : vector<1x2x128xi32> to vector<2x128xi32>
    %cst = arith.constant dense<0xFF800000> : vector<2x128xf32>
    %7 = vector.multi_reduction <maximumf>, %4, %cst [0] : vector<4x2x128xf32> to vector<2x128xf32>
    %8 = vector.shape_cast %7 : vector<2x128xf32> to vector<1x2x128xf32>
    %9 = vector.broadcast %8 : vector<1x2x128xf32> to vector<4x2x128xf32>
    %10 = arith.subf %4, %9 : vector<4x2x128xf32>
    %11 = math.exp %10 : vector<4x2x128xf32>
    %cst_7 = arith.constant dense<0.000000e+00> : vector<2x128xf32>
    %12 = vector.multi_reduction <add>, %11, %cst_7 [0] : vector<4x2x128xf32> to vector<2x128xf32>
    %13 = vector.shape_cast %12 : vector<2x128xf32> to vector<1x2x128xf32>
    %14 = vector.broadcast %8 : vector<1x2x128xf32> to vector<4x2x128xf32>
    %15 = arith.subf %4, %14 : vector<4x2x128xf32>
    %16 = math.log %13 : vector<1x2x128xf32>
    %17 = vector.broadcast %16 : vector<1x2x128xf32> to vector<4x2x128xf32>
    %18 = arith.subf %15, %17 : vector<4x2x128xf32>
    %19 = vector.broadcast %13 : vector<1x2x128xf32> to vector<4x2x128xf32>
    %20 = arith.divf %11, %19 : vector<4x2x128xf32>
    %21 = tpu.iota {dimensions = array<i32: 0>} : vector<4x2x128xi32>
    %22 = vector.shape_cast %6 : vector<2x128xi32> to vector<1x2x128xi32>
    %23 = vector.broadcast %22 : vector<1x2x128xi32> to vector<4x2x128xi32>
    %24 = arith.cmpi eq, %21, %23 : vector<4x2x128xi32>
    %25 = arith.extui %24 : vector<4x2x128xi1> to vector<4x2x128xi32>
    %26 = arith.sitofp %25 : vector<4x2x128xi32> to vector<4x2x128xf32>
    %c0_i32_8 = arith.constant 0 : i32
    %27 = vector.broadcast %c0_i32_8 : i32 to vector<2x128xi32>
    %28 = arith.cmpi sge, %6, %27 : vector<2x128xi32>
    %29 = arith.extui %28 : vector<2x128xi1> to vector<2x128xi32>
    %30 = arith.sitofp %29 : vector<2x128xi32> to vector<2x128xf32>
    %31 = vector.shape_cast %30 : vector<2x128xf32> to vector<1x2x128xf32>
    %c0_9 = arith.constant 0 : index
    %c0_10 = arith.constant 0 : index
    %c0_11 = arith.constant 0 : index
    %32 = vector.load %arg8[%c0_9, %c0_10, %c0_11] : memref<4x1x128xf32, #tpu.memory_space<vmem>>, vector<4x1x128xf32>
    %cst_12 = arith.constant 0.000000e+00 : f32
    %33 = vector.broadcast %cst_12 : f32 to vector<4x2x128xf32>
    %34 = arith.subf %33, %18 : vector<4x2x128xf32>
    %35 = arith.mulf %26, %34 : vector<4x2x128xf32>
    %cst_13 = arith.constant dense<0.000000e+00> : vector<4x128xf32>
    %36 = vector.multi_reduction <add>, %35, %cst_13 [1] : vector<4x2x128xf32> to vector<4x128xf32>
    %37 = vector.shape_cast %36 : vector<4x128xf32> to vector<4x1x128xf32>
    %38 = arith.addf %32, %37 : vector<4x1x128xf32>
    %c0_14 = arith.constant 0 : index
    %c0_15 = arith.constant 0 : index
    %c0_16 = arith.constant 0 : index
    %39 = vector.load %arg8[%c0_14, %c0_15, %c0_16] : memref<4x1x128xf32, #tpu.memory_space<vmem>>, vector<4x1x128xf32>
    tpu.vector_store %arg8[%c0_14, %c0_15, %c0_16], %38 {strides = array<i32>} : memref<4x1x128xf32, #tpu.memory_space<vmem>>, vector<4x1x128xf32>,
    %c0_17 = arith.constant 0 : index
    %c0_18 = arith.constant 0 : index
    %c0_19 = arith.constant 0 : index
    %40 = vector.load %arg9[%c0_17, %c0_18, %c0_19] : memref<4x1x128xf32, #tpu.memory_space<vmem>>, vector<4x1x128xf32>
    %41 = arith.mulf %26, %20 : vector<4x2x128xf32>
    %cst_20 = arith.constant dense<0.000000e+00> : vector<4x128xf32>
    %42 = vector.multi_reduction <add>, %41, %cst_20 [1] : vector<4x2x128xf32> to vector<4x128xf32>
    %43 = vector.shape_cast %42 : vector<4x128xf32> to vector<4x1x128xf32>
    %44 = arith.addf %40, %43 : vector<4x1x128xf32>
    %c0_21 = arith.constant 0 : index
    %c0_22 = arith.constant 0 : index
    %c0_23 = arith.constant 0 : index
    %45 = vector.load %arg9[%c0_21, %c0_22, %c0_23] : memref<4x1x128xf32, #tpu.memory_space<vmem>>, vector<4x1x128xf32>
    tpu.vector_store %arg9[%c0_21, %c0_22, %c0_23], %44 {strides = array<i32>} : memref<4x1x128xf32, #tpu.memory_space<vmem>>, vector<4x1x128xf32>,
    %c0_24 = arith.constant 0 : index
    %c0_25 = arith.constant 0 : index
    %c0_26 = arith.constant 0 : index
    %46 = vector.load %arg10[%c0_24, %c0_25, %c0_26] : memref<4x1x128xf32, #tpu.memory_space<vmem>>, vector<4x1x128xf32>
    %47 = vector.broadcast %31 : vector<1x2x128xf32> to vector<4x2x128xf32>
    %48 = arith.mulf %20, %47 : vector<4x2x128xf32>
    %cst_27 = arith.constant dense<0.000000e+00> : vector<4x128xf32>
    %49 = vector.multi_reduction <add>, %48, %cst_27 [1] : vector<4x2x128xf32> to vector<4x128xf32>
    %50 = vector.shape_cast %49 : vector<4x128xf32> to vector<4x1x128xf32>
    %51 = arith.addf %46, %50 : vector<4x1x128xf32>
    %c0_28 = arith.constant 0 : index
    %c0_29 = arith.constant 0 : index
    %c0_30 = arith.constant 0 : index
    %52 = vector.load %arg10[%c0_28, %c0_29, %c0_30] : memref<4x1x128xf32, #tpu.memory_space<vmem>>, vector<4x1x128xf32>
    tpu.vector_store %arg10[%c0_28, %c0_29, %c0_30], %51 {strides = array<i32>} : memref<4x1x128xf32, #tpu.memory_space<vmem>>, vector<4x1x128xf32>,
    %c0_31 = arith.constant 0 : index
    %c0_32 = arith.constant 0 : index
    %c0_33 = arith.constant 0 : index
    %53 = vector.load %arg11[%c0_31, %c0_32, %c0_33] : memref<4x1x128xf32, #tpu.memory_space<vmem>>, vector<4x1x128xf32>
    %cst_34 = arith.constant dense<0.000000e+00> : vector<4x128xf32>
    %54 = vector.multi_reduction <add>, %26, %cst_34 [1] : vector<4x2x128xf32> to vector<4x128xf32>
    %55 = vector.shape_cast %54 : vector<4x128xf32> to vector<4x1x128xf32>
    %56 = arith.addf %53, %55 : vector<4x1x128xf32>
    %c0_35 = arith.constant 0 : index
    %c0_36 = arith.constant 0 : index
    %c0_37 = arith.constant 0 : index
    %57 = vector.load %arg11[%c0_35, %c0_36, %c0_37] : memref<4x1x128xf32, #tpu.memory_space<vmem>>, vector<4x1x128xf32>
    tpu.vector_store %arg11[%c0_35, %c0_36, %c0_37], %56 {strides = array<i32>} : memref<4x1x128xf32, #tpu.memory_space<vmem>>, vector<4x1x128xf32>,
    %c0_i32_38 = arith.constant 0 : i32
    %58 = arith.cmpi eq, %arg1, %c0_i32_38 : i32
    %59 = arith.extui %58 : i1 to i32
    %c0_i32_39 = arith.constant 0 : i32
    %60 = arith.cmpi ne, %59, %c0_i32_39 : i32
    scf.if %60 {
      %c0_40 = arith.constant 0 : index
      %c0_41 = arith.constant 0 : index
      %c0_42 = arith.constant 0 : index
      %61 = vector.load %arg8[%c0_40, %c0_41, %c0_42] : memref<4x1x128xf32, #tpu.memory_space<vmem>>, vector<4x1x128xf32>
      %c0_43 = arith.constant 0 : index
      %c0_44 = arith.constant 0 : index
      %c0_45 = arith.constant 0 : index
      %c0_46 = arith.constant 0 : index
      %62 = vector.load %arg4[%c0_43, %c0_44, %c0_45, %c0_46] : memref<1x4x1x128xf32, #tpu.memory_space<vmem>>, vector<1x4x1x128xf32>
      %63 = vector.shape_cast %62 : vector<1x4x1x128xf32> to vector<4x1x128xf32>
      %64 = vector.shape_cast %61 : vector<4x1x128xf32> to vector<1x4x1x128xf32>
      tpu.vector_store %arg4[%c0_43, %c0_44, %c0_45, %c0_46], %64 {strides = array<i32>} : memref<1x4x1x128xf32, #tpu.memory_space<vmem>>, vector<1x4x1x128xf32>,
      %c0_47 = arith.constant 0 : index
      %c0_48 = arith.constant 0 : index
      %c0_49 = arith.constant 0 : index
      %65 = vector.load %arg9[%c0_47, %c0_48, %c0_49] : memref<4x1x128xf32, #tpu.memory_space<vmem>>, vector<4x1x128xf32>
      %c0_50 = arith.constant 0 : index
      %c0_51 = arith.constant 0 : index
      %c0_52 = arith.constant 0 : index
      %c0_53 = arith.constant 0 : index
      %66 = vector.load %arg5[%c0_50, %c0_51, %c0_52, %c0_53] : memref<1x4x1x128xf32, #tpu.memory_space<vmem>>, vector<1x4x1x128xf32>
      %67 = vector.shape_cast %66 : vector<1x4x1x128xf32> to vector<4x1x128xf32>
      %68 = vector.shape_cast %65 : vector<4x1x128xf32> to vector<1x4x1x128xf32>
      tpu.vector_store %arg5[%c0_50, %c0_51, %c0_52, %c0_53], %68 {strides = array<i32>} : memref<1x4x1x128xf32, #tpu.memory_space<vmem>>, vector<1x4x1x128xf32>,
      %c0_54 = arith.constant 0 : index
      %c0_55 = arith.constant 0 : index
      %c0_56 = arith.constant 0 : index
      %69 = vector.load %arg10[%c0_54, %c0_55, %c0_56] : memref<4x1x128xf32, #tpu.memory_space<vmem>>, vector<4x1x128xf32>
      %c0_57 = arith.constant 0 : index
      %c0_58 = arith.constant 0 : index
      %c0_59 = arith.constant 0 : index
      %c0_60 = arith.constant 0 : index
      %70 = vector.load %arg6[%c0_57, %c0_58, %c0_59, %c0_60] : memref<1x4x1x128xf32, #tpu.memory_space<vmem>>, vector<1x4x1x128xf32>
      %71 = vector.shape_cast %70 : vector<1x4x1x128xf32> to vector<4x1x128xf32>
      %72 = vector.shape_cast %69 : vector<4x1x128xf32> to vector<1x4x1x128xf32>
      tpu.vector_store %arg6[%c0_57, %c0_58, %c0_59, %c0_60], %72 {strides = array<i32>} : memref<1x4x1x128xf32, #tpu.memory_space<vmem>>, vector<1x4x1x128xf32>,
      %c0_61 = arith.constant 0 : index
      %c0_62 = arith.constant 0 : index
      %c0_63 = arith.constant 0 : index
      %73 = vector.load %arg11[%c0_61, %c0_62, %c0_63] : memref<4x1x128xf32, #tpu.memory_space<vmem>>, vector<4x1x128xf32>
      %c0_64 = arith.constant 0 : index
      %c0_65 = arith.constant 0 : index
      %c0_66 = arith.constant 0 : index
      %c0_67 = arith.constant 0 : index
      %74 = vector.load %arg7[%c0_64, %c0_65, %c0_66, %c0_67] : memref<1x4x1x128xf32, #tpu.memory_space<vmem>>, vector<1x4x1x128xf32>
      %75 = vector.shape_cast %74 : vector<1x4x1x128xf32> to vector<4x1x128xf32>
      %76 = vector.shape_cast %73 : vector<4x1x128xf32> to vector<1x4x1x128xf32>
      tpu.vector_store %arg7[%c0_64, %c0_65, %c0_66, %c0_67], %76 {strides = array<i32>} : memref<1x4x1x128xf32, #tpu.memory_space<vmem>>, vector<1x4x1x128xf32>,
    } else {
    }
    return
  }
  func.func @transform_0(%arg0: i32, %arg1: i32) -> (i32, i32, i32, i32) {
    %c0_i32 = arith.constant 0 : i32
    %c0_i32_0 = arith.constant 0 : i32
    %c0_i32_1 = arith.constant 0 : i32
    return %arg0, %c0_i32, %arg1, %c0_i32_0 : i32, i32, i32, i32
  }
  func.func @transform_1(%arg0: i32, %arg1: i32) -> (i32, i32, i32) {
    %c0_i32 = arith.constant 0 : i32
    %c0_i32_0 = arith.constant 0 : i32
    return %arg0, %arg1, %c0_i32 : i32, i32, i32
  }
  func.func @transform_2(%arg0: i32, %arg1: i32) -> (i32, i32, i32, i32) {
    %c0_i32 = arith.constant 0 : i32
    %c0_i32_0 = arith.constant 0 : i32
    %c0_i32_1 = arith.constant 0 : i32
    %c0_i32_2 = arith.constant 0 : i32
    return %arg0, %c0_i32, %c0_i32_0, %c0_i32_1 : i32, i32, i32, i32
  }
  func.func @transform_3(%arg0: i32, %arg1: i32) -> (i32, i32, i32, i32) {
    %c0_i32 = arith.constant 0 : i32
    %c0_i32_0 = arith.constant 0 : i32
    %c0_i32_1 = arith.constant 0 : i32
    %c0_i32_2 = arith.constant 0 : i32
    return %arg0, %c0_i32, %c0_i32_0, %c0_i32_1 : i32, i32, i32, i32
  }
  func.func @transform_4(%arg0: i32, %arg1: i32) -> (i32, i32, i32, i32) {
    %c0_i32 = arith.constant 0 : i32
    %c0_i32_0 = arith.constant 0 : i32
    %c0_i32_1 = arith.constant 0 : i32
    %c0_i32_2 = arith.constant 0 : i32
    return %arg0, %c0_i32, %c0_i32_0, %c0_i32_1 : i32, i32, i32, i32
  }
  func.func @transform_5(%arg0: i32, %arg1: i32) -> (i32, i32, i32, i32) {
    %c0_i32 = arith.constant 0 : i32
    %c0_i32_0 = arith.constant 0 : i32
    %c0_i32_1 = arith.constant 0 : i32
    %c0_i32_2 = arith.constant 0 : i32
    return %arg0, %c0_i32, %c0_i32_0, %c0_i32_1 : i32, i32, i32, i32
  }
}

</mosaic_0001>

<llo_original>
// kernel: tpu_custom_call.1
$region0: #{tpu_custom_call.1}
  #allocation0 [shape = 'u32[]', space=smem, size = 0x4, offset = 0x4, fixed_abs, tag = 'smem constant byte address 0x4 - core index']
  #allocation1 [shape = 'u32[144,128]{1,0:T(1,128)}', space=vmem, size = 0x12000, scoped, tag = 'internal scratch']
  #allocation2 [shape = 'f32[4,1,128]{2,1,0:T(1,128)}', space=vmem, size = 0x800, scoped, tag = 'scratch operand']
  #allocation3 [shape = 'f32[4,1,128]{2,1,0:T(1,128)}', space=vmem, size = 0x800, scoped, tag = 'scratch operand']
  #allocation4 [shape = 'f32[4,1,128]{2,1,0:T(1,128)}', space=vmem, size = 0x800, scoped, tag = 'scratch operand']
  #allocation5 [shape = 'f32[4,1,128]{2,1,0:T(1,128)}', space=vmem, size = 0x800, scoped, tag = 'scratch operand']
  %s0 = inlined_call_operand.hbm [shape: f32[4,4,2,128], index: 0, kind: input, shape index: {}]
  %s1 = inlined_call_operand.hbm [shape: s32[4,2,128], index: 1, kind: input, shape index: {}]
  %s2 = inlined_call_operand.hbm [shape: f32[4,4,1,128], index: 2, kind: output, shape index: {0}]
  %s3 = inlined_call_operand.hbm [shape: f32[4,4,1,128], index: 3, kind: output, shape index: {1}]
  %s4 = inlined_call_operand.hbm [shape: f32[4,4,1,128], index: 4, kind: output, shape index: {2}]
  %s5 = inlined_call_operand.hbm [shape: f32[4,4,1,128], index: 5, kind: output, shape index: {3}]
  %6 = xla_tuple %s2, %s3, %s4, %s5
  %s7 = sld [smem:[#allocation0]]
  $region81: #{tpu_custom_call.1} parent=0
    _
  %s9 = ssub.s32 1, %s7
  %s10 = scalar_select 0, %s9, %s7
  $region1: #{tpu_custom_call.1} parent=0
    #allocation6 [shape = 'u8[8192]{0}', space=vmem, size = 0x2000, scoped, tag = 'input window, operand 0']
    #allocation7 [shape = 's32[2]{0}', space=sflag, size = 0x8, scoped, tag = 'scoped memory for tpu_custom_call.1']
    #allocation8 [shape = 's32[2]{0}', space=sflag, size = 0x8, scoped, tag = 'scoped memory for tpu_custom_call.1']
    #allocation9 [shape = 'u8[2048]{0}', space=vmem, size = 0x800, scoped, tag = 'input window, operand 1']
    #allocation10 [shape = 's32[2]{0}', space=sflag, size = 0x8, scoped, tag = 'scoped memory for tpu_custom_call.1']
    #allocation11 [shape = 'u8[4096]{0}', space=vmem, size = 0x1000, scoped, tag = 'output window, operand 0']
    #allocation12 [shape = 'u8[4096]{0}', space=vmem, size = 0x1000, scoped, tag = 'output window, operand 1']
    #allocation13 [shape = 's32[2]{0}', space=sflag, size = 0x8, scoped, tag = 'scoped memory for tpu_custom_call.1']
    #allocation14 [shape = 'u8[4096]{0}', space=vmem, size = 0x1000, scoped, tag = 'output window, operand 2']
    #allocation15 [shape = 'u8[4096]{0}', space=vmem, size = 0x1000, scoped, tag = 'output window, operand 3']
    #allocation16 [shape = 's32[2]{0}', space=sflag, size = 0x8, scoped, tag = 'scoped memory for tpu_custom_call.1']
    %11 = vsyncpa [#allocation7], 0
    %s12 = scalar_lea.sflag [#allocation7], 1
    %13 = vsyncpa %s12, 0
    %14 = vsyncpa [#allocation10], 0
    %s15 = scalar_lea.sflag [#allocation10], 1
    %16 = vsyncpa %s15, 0
    %17 = vsyncpa [#allocation8], 0
    %s18 = scalar_lea.sflag [#allocation8], 1
    %19 = vsyncpa %s18, 0
    %20 = vsyncpa [#allocation13], 0
    %s21 = scalar_lea.sflag [#allocation13], 1
    %22 = vsyncpa %s21, 0
    %23 = vsyncpa [#allocation16], 0
    %s24 = scalar_lea.sflag [#allocation16], 1
    %25 = vsyncpa %s24, 0
    loop: start=0, step=1, limit=6
    $region2: #{tpu_custom_call.1} parent=1 // loop_pre_header
      _
    $region3: #{tpu_custom_call.1} parent=1 // loop_header
      %s27 = sphi 0, %s31
      %p28 = scmp.ge.s32.totalorder %s27, 6
      %s34 = sphi 0, %s46
      %s35 = sphi 0, %s42
      %s36 = sphi 0, %s34
      %s37 = sphi 0, %s35
      %s38 = sphi 0, %s36
      %s39 = sphi 0, %s37
      %s51 = sphi 0, %s53
      %s54 = sphi 0, %s51
      %s55 = sphi 0, %s54
      %s71 = sphi 0, %s55
      %s79 = sphi 0, %s81
      %s82 = sphi 0, %s79
      %s83 = sphi 0, %s82
      %s99 = sphi 0, %s83
      %s105 = sphi 0, %s107
      %s108 = sphi 0, %s105
      %s109 = sphi 0, %s108
      %s125 = sphi 0, %s109
      %s131 = sphi 0, %s133
      %s134 = sphi 0, %s131
      %s135 = sphi 0, %s134
      %s151 = sphi 0, %s135
      %s157 = sphi 0, %s159
      %s160 = sphi 0, %s157
      %s161 = sphi 0, %s160
      %s177 = sphi 0, %s161
      %s183 = sphi 0, %s185
      %s186 = sphi 0, %s183
      %s187 = sphi 0, %s186
      %s203 = sphi 0, %s187
    $region4: #{tpu_custom_call.1} parent=1 // loop_header_branch
      %30 = sbr.rel (%p28) target = $region8
    $region5: #{tpu_custom_call.1} parent=1 // loop_body
      %s32 = ssub.s32 %s27, 1
      %s33 = ssub.s32 %s27, 2
      %s40 = sadd.s32 1, %s35
      %p41 = scmp.ge.s32.totalorder %s40, 1
      %s42 = scalar_select %p41, 0, %s40
      %s43 = sadd.s32 1, %s34
      %s44 = scalar_select %p41, %s43, %s34
      %p45 = scmp.ge.s32.totalorder %s44, 4
      %s46 = scalar_select %p45, 0, %s44
      %s47 = ssub.s32 %s34, %s46
      %s48 = ssub.s32 %s35, %s42
      %s49 = sor.u32 %s47, %s48
      %p50 = scmp.eq.s32.totalorder %s49, 0
      %s52 = sadd.s32 %s51, 1
      %s53 = scalar_select %p50, %s51, %s52
      %p56 = pneg %p50
      %p57 = scmp.eq.s32.totalorder %s27, 3
      %p58 = por %p56, %p57
      %p59 = scmp.ne.s32.totalorder %s51, %s54
      %p60 = scmp.eq.s32.totalorder %s27, 0
      %p61 = por %p59, %p60
      %p62 = scmp.ne.s32.totalorder %s51, %s54
      %p63 = scmp.eq.s32.totalorder %s32, 3
      %p64 = por %p62, %p63
      %p65 = scmp.ne.s32.totalorder %s54, %s55
      %p66 = scmp.eq.s32.totalorder %s32, 0
      %p67 = por %p65, %p66
      %p68 = scmp.ne.s32.totalorder %s54, %s55
      %p69 = scmp.eq.s32.totalorder %s33, 3
      %p70 = por %p68, %p69
      %p72 = scmp.ne.s32.totalorder %s55, %s71
      %p73 = scmp.eq.s32.totalorder %s33, 0
      %p74 = por %p72, %p73
      %s75 = ssub.s32 %s34, %s46
      %s76 = ssub.s32 %s35, %s42
      %s77 = sor.u32 %s75, %s76
      %p78 = scmp.eq.s32.totalorder %s77, 0
      %s80 = sadd.s32 %s79, 1
      %s81 = scalar_select %p78, %s79, %s80
      %p84 = pneg %p78
      %p85 = scmp.eq.s32.totalorder %s27, 3
      %p86 = por %p84, %p85
      %p87 = scmp.ne.s32.totalorder %s79, %s82
      %p88 = scmp.eq.s32.totalorder %s27, 0
      %p89 = por %p87, %p88
      %p90 = scmp.ne.s32.totalorder %s79, %s82
      %p91 = scmp.eq.s32.totalorder %s32, 3
      %p92 = por %p90, %p91
      %p93 = scmp.ne.s32.totalorder %s82, %s83
      %p94 = scmp.eq.s32.totalorder %s32, 0
      %p95 = por %p93, %p94
      %p96 = scmp.ne.s32.totalorder %s82, %s83
      %p97 = scmp.eq.s32.totalorder %s33, 3
      %p98 = por %p96, %p97
      %p100 = scmp.ne.s32.totalorder %s83, %s99
      %p101 = scmp.eq.s32.totalorder %s33, 0
      %p102 = por %p100, %p101
      %s103 = ssub.s32 %s34, %s46
      %p104 = scmp.eq.s32.totalorder %s103, 0
      %s106 = sadd.s32 %s105, 1
      %s107 = scalar_select %p104, %s105, %s106
      %p110 = pneg %p104
      %p111 = scmp.eq.s32.totalorder %s27, 3
      %p112 = por %p110, %p111
      %p113 = scmp.ne.s32.totalorder %s105, %s108
      %p114 = scmp.eq.s32.totalorder %s27, 0
      %p115 = por %p113, %p114
      %p116 = scmp.ne.s32.totalorder %s105, %s108
      %p117 = scmp.eq.s32.totalorder %s32, 3
      %p118 = por %p116, %p117
      %p119 = scmp.ne.s32.totalorder %s108, %s109
      %p120 = scmp.eq.s32.totalorder %s32, 0
      %p121 = por %p119, %p120
      %p122 = scmp.ne.s32.totalorder %s108, %s109
      %p123 = scmp.eq.s32.totalorder %s33, 3
      %p124 = por %p122, %p123
      %p126 = scmp.ne.s32.totalorder %s109, %s125
      %p127 = scmp.eq.s32.totalorder %s33, 0
      %p128 = por %p126, %p127
      %s129 = ssub.s32 %s34, %s46
      %p130 = scmp.eq.s32.totalorder %s129, 0
      %s132 = sadd.s32 %s131, 1
      %s133 = scalar_select %p130, %s131, %s132
      %p136 = pneg %p130
      %p137 = scmp.eq.s32.totalorder %s27, 3
      %p138 = por %p136, %p137
      %p139 = scmp.ne.s32.totalorder %s131, %s134
      %p140 = scmp.eq.s32.totalorder %s27, 0
      %p141 = por %p139, %p140
      %p142 = scmp.ne.s32.totalorder %s131, %s134
      %p143 = scmp.eq.s32.totalorder %s32, 3
      %p144 = por %p142, %p143
      %p145 = scmp.ne.s32.totalorder %s134, %s135
      %p146 = scmp.eq.s32.totalorder %s32, 0
      %p147 = por %p145, %p146
      %p148 = scmp.ne.s32.totalorder %s134, %s135
      %p149 = scmp.eq.s32.totalorder %s33, 3
      %p150 = por %p148, %p149
      %p152 = scmp.ne.s32.totalorder %s135, %s151
      %p153 = scmp.eq.s32.totalorder %s33, 0
      %p154 = por %p152, %p153
      %s155 = ssub.s32 %s34, %s46
      %p156 = scmp.eq.s32.totalorder %s155, 0
      %s158 = sadd.s32 %s157, 1
      %s159 = scalar_select %p156, %s157, %s158
      %p162 = pneg %p156
      %p163 = scmp.eq.s32.totalorder %s27, 3
      %p164 = por %p162, %p163
      %p165 = scmp.ne.s32.totalorder %s157, %s160
      %p166 = scmp.eq.s32.totalorder %s27, 0
      %p167 = por %p165, %p166
      %p168 = scmp.ne.s32.totalorder %s157, %s160
      %p169 = scmp.eq.s32.totalorder %s32, 3
      %p170 = por %p168, %p169
      %p171 = scmp.ne.s32.totalorder %s160, %s161
      %p172 = scmp.eq.s32.totalorder %s32, 0
      %p173 = por %p171, %p172
      %p174 = scmp.ne.s32.totalorder %s160, %s161
      %p175 = scmp.eq.s32.totalorder %s33, 3
      %p176 = por %p174, %p175
      %p178 = scmp.ne.s32.totalorder %s161, %s177
      %p179 = scmp.eq.s32.totalorder %s33, 0
      %p180 = por %p178, %p179
      %s181 = ssub.s32 %s34, %s46
      %p182 = scmp.eq.s32.totalorder %s181, 0
      %s184 = sadd.s32 %s183, 1
      %s185 = scalar_select %p182, %s183, %s184
      %p188 = pneg %p182
      %p189 = scmp.eq.s32.totalorder %s27, 3
      %p190 = por %p188, %p189
      %p191 = scmp.ne.s32.totalorder %s183, %s186
      %p192 = scmp.eq.s32.totalorder %s27, 0
      %p193 = por %p191, %p192
      %p194 = scmp.ne.s32.totalorder %s183, %s186
      %p195 = scmp.eq.s32.totalorder %s32, 3
      %p196 = por %p194, %p195
      %p197 = scmp.ne.s32.totalorder %s186, %s187
      %p198 = scmp.eq.s32.totalorder %s32, 0
      %p199 = por %p197, %p198
      %p200 = scmp.ne.s32.totalorder %s186, %s187
      %p201 = scmp.eq.s32.totalorder %s33, 3
      %p202 = por %p200, %p201
      %p204 = scmp.ne.s32.totalorder %s187, %s203
      %p205 = scmp.eq.s32.totalorder %s33, 0
      %p206 = por %p204, %p205
      %p207 = scmp.le.s32.totalorder 1, %s27
      %p208 = scmp.lt.s32.totalorder %s27, 5
      %p209 = pnand %p207, %p208
      %p210 = pneg %p209
      // Predicated region
      $region9: #{tpu_custom_call.1} parent=5 // pred_check
        _
      $region10: #{tpu_custom_call.1} parent=5 // pred_check_branch
        %212 = sbr.rel (%p209) target = $region12
      $region11: #{tpu_custom_call.1} parent=5 // pred_region
        %s213 = ssub.s32 %s27, 1
      $region12: #{tpu_custom_call.1} parent=5 // pred_fallthru
        _
      %p214 = scmp.lt.s32.totalorder %s27, 4
      // Predicated region
      $region13: #{tpu_custom_call.1} parent=5 // pred_check
        %p215 = pneg %p214
      $region14: #{tpu_custom_call.1} parent=5 // pred_check_branch
        %217 = sbr.rel (%p215) target = $region16
      $region15: #{tpu_custom_call.1} parent=5 // pred_region
        // Predicated region
        $region17: #{tpu_custom_call.1} parent=15 // pred_check
          %p218 = pneg %p61
        $region18: #{tpu_custom_call.1} parent=15 // pred_check_branch
          %220 = sbr.rel (%p218) target = $region20
        $region19: #{tpu_custom_call.1} parent=15 // pred_region
          %s221 = sand.u32 %s51, 1
          %s222 = scalar_lea.sflag [#allocation7], %s221
          %s223 = sand.u32 %s51, 1
          %s224 = smul.addr %s223, 8
          %s225 = scalar_lea.vmem [#allocation6], %s224
          %s227 = ssub.s32 128, 128
          %228 = vsyncadd %s222, %s227
          %s229 = smul.addr %s34, 4
          %s230 = sadd.s32 %s35, %s229
          %s231 = smul.addr %s230, 32
          %s232 = scalar_lea.hbm %s0, %s231
          %s233 = sshll.u32 %s225, 4
          %s234 = int_to_ptr.vmem [resolvable:$true] %s233
          %239 = dma.hbm_to_vmem [thread:$0]  %s232, 128, %s234, %s222, 32, 32, 2
        $region20: #{tpu_custom_call.1} parent=15 // pred_fallthru
          _
        // Predicated region
        $region21: #{tpu_custom_call.1} parent=15 // pred_check
          %p240 = pneg %p89
        $region22: #{tpu_custom_call.1} parent=15 // pred_check_branch
          %242 = sbr.rel (%p240) target = $region24
        $region23: #{tpu_custom_call.1} parent=15 // pred_region
          %s243 = sand.u32 %s79, 1
          %s244 = scalar_lea.sflag [#allocation10], %s243
          %s245 = sand.u32 %s79, 1
          %s246 = smul.addr %s245, 2
          %s247 = scalar_lea.vmem [#allocation9], %s246
          %s249 = ssub.s32 32, 32
          %250 = vsyncadd %s244, %s249
          %s251 = sadd.s32 %s35, %s34
          %s252 = smul.addr %s251, 32
          %s253 = scalar_lea.hbm %s1, %s252
          %s255 = sshll.u32 %s247, 4
          %s256 = int_to_ptr.vmem [resolvable:$true] %s255
          %258 = dma.hbm_to_vmem [thread:$0]  %s253, 32, %s256, %s244
        $region24: #{tpu_custom_call.1} parent=15 // pred_fallthru
          _
      $region16: #{tpu_custom_call.1} parent=5 // pred_fallthru
        _
      %p259 = scmp.le.s32.totalorder 1, %s27
      %p260 = scmp.lt.s32.totalorder %s27, 5
      %p261 = pnand %p259, %p260
      %p262 = pneg %p261
      // Predicated region
      $region25: #{tpu_custom_call.1} parent=5 // pred_check
        _
      $region26: #{tpu_custom_call.1} parent=5 // pred_check_branch
        %264 = sbr.rel (%p261) target = $region28
      $region27: #{tpu_custom_call.1} parent=5 // pred_region
        %s265 = ssub.s32 %s27, 1
        %s266 = sand.u32 %s54, 1
        %s267 = scalar_lea.sflag [#allocation7], %s266
        %s268 = sand.u32 %s54, 1
        %s269 = smul.addr %s268, 8
        %s270 = scalar_lea.vmem [#allocation6], %s269
        // Predicated region
        $region29: #{tpu_custom_call.1} parent=27 // pred_check
          %p271 = pneg %p67
        $region30: #{tpu_custom_call.1} parent=27 // pred_check_branch
          %273 = sbr.rel (%p271) target = $region32
        $region31: #{tpu_custom_call.1} parent=27 // pred_region
          %274 = dma.done %s267, 128
        $region32: #{tpu_custom_call.1} parent=27 // pred_fallthru
          _
        %s275 = sand.u32 %s82, 1
        %s276 = scalar_lea.sflag [#allocation10], %s275
        %s277 = sand.u32 %s82, 1
        %s278 = smul.addr %s277, 2
        %s279 = scalar_lea.vmem [#allocation9], %s278
        // Predicated region
        $region33: #{tpu_custom_call.1} parent=27 // pred_check
          %p280 = pneg %p95
        $region34: #{tpu_custom_call.1} parent=27 // pred_check_branch
          %282 = sbr.rel (%p280) target = $region36
        $region35: #{tpu_custom_call.1} parent=27 // pred_region
          %283 = dma.done %s276, 32
        $region36: #{tpu_custom_call.1} parent=27 // pred_fallthru
          _
        %s284 = sand.u32 %s54, 1
        %s285 = scalar_lea.sflag [#allocation7], %s284
        %s286 = sand.u32 %s54, 1
        %s287 = smul.addr %s286, 8
        %s288 = scalar_lea.vmem [#allocation6], %s287
        %p289 = pneg %p67
        %p290 = pneg %p64
        %s291 = sand.u32 %s82, 1
        %s292 = scalar_lea.sflag [#allocation10], %s291
        %s293 = sand.u32 %s82, 1
        %s294 = smul.addr %s293, 2
        %s295 = scalar_lea.vmem [#allocation9], %s294
        %p296 = pneg %p95
        %p297 = pneg %p92
        %p298 = pneg %p121
        %p299 = pneg %p118
        %s300 = sand.u32 %s108, 1
        %s301 = scalar_lea.sflag [#allocation8], %s300
        %s302 = sand.u32 %s108, 1
        %s303 = smul.addr %s302, 4
        %s304 = scalar_lea.vmem [#allocation11], %s303
        %p305 = pneg %p147
        %p306 = pneg %p144
        %s307 = sand.u32 %s32, 1
        %s308 = scalar_lea.sflag [#allocation13], %s307
        %s309 = sand.u32 %s134, 1
        %s310 = smul.addr %s309, 4
        %s311 = scalar_lea.vmem [#allocation12], %s310
        %p312 = pneg %p173
        %p313 = pneg %p170
        %s314 = sand.u32 %s32, 1
        %s315 = scalar_lea.sflag [#allocation13], %s314
        %s316 = sand.u32 %s160, 1
        %s317 = smul.addr %s316, 4
        %s318 = scalar_lea.vmem [#allocation14], %s317
        %p319 = pneg %p199
        %p320 = pneg %p196
        %s321 = sand.u32 %s186, 1
        %s322 = scalar_lea.sflag [#allocation16], %s321
        %s323 = sand.u32 %s186, 1
        %s324 = smul.addr %s323, 4
        %s325 = scalar_lea.vmem [#allocation15], %s324
        %p326 = scmp.eq.s32.totalorder %s37, 0
        // Predicated region
        $region37: #{tpu_custom_call.1} parent=27 // pred_check
          %p327 = pneg %p326
        $region38: #{tpu_custom_call.1} parent=27 // pred_check_branch
          %329 = sbr.rel (%p327) target = $region40
        $region39: #{tpu_custom_call.1} parent=27 // pred_region
          %330 = vst [vmem:[#allocation2] sm:$0x1] 0.0
          %331 = vst [vmem:[#allocation2 + $0x1] sm:$0x1] 0.0
          %332 = vst [vmem:[#allocation2 + $0x2] sm:$0x1] 0.0
          %333 = vst [vmem:[#allocation2 + $0x3] sm:$0x1] 0.0
          %334 = vst [vmem:[#allocation3] sm:$0x1] 0.0
          %335 = vst [vmem:[#allocation3 + $0x1] sm:$0x1] 0.0
          %336 = vst [vmem:[#allocation3 + $0x2] sm:$0x1] 0.0
          %337 = vst [vmem:[#allocation3 + $0x3] sm:$0x1] 0.0
          %338 = vst [vmem:[#allocation4] sm:$0x1] 0.0
          %339 = vst [vmem:[#allocation4 + $0x1] sm:$0x1] 0.0
          %340 = vst [vmem:[#allocation4 + $0x2] sm:$0x1] 0.0
          %341 = vst [vmem:[#allocation4 + $0x3] sm:$0x1] 0.0
          %342 = vst [vmem:[#allocation5] sm:$0x1] 0.0
          %343 = vst [vmem:[#allocation5 + $0x1] sm:$0x1] 0.0
          %344 = vst [vmem:[#allocation5 + $0x2] sm:$0x1] 0.0
          %345 = vst [vmem:[#allocation5 + $0x3] sm:$0x1] 0.0
        $region40: #{tpu_custom_call.1} parent=27 // pred_fallthru
          _
        %v346 = vld [vmem:[%s270] sm:$0x3]
        %v347 = vld [vmem:[%s270 + $0x2] sm:$0x3]
        %v348 = vld [vmem:[%s270 + $0x4] sm:$0x3]
        %v349 = vld [vmem:[%s270 + $0x6] sm:$0x3]
        %v350 = vld [vmem:[%s279] sm:$0x3]
        %vm351 = vcmask 1041408
        %v352 = vsel %vm351, %v346, -inf
        %v353 = vsel %vm351, %v347, -inf
        %v354 = vsel %vm351, %v348, -inf
        %v355 = vsel %vm351, %v349, -inf
        %v356 = vmax.f32 %v352, %v353
        %v357 = vmax.f32 %v354, %v355
        %v358 = vmax.f32 %v356, %v357
        %v359 = vsub.f32 %v346, %v358
        %v360 = vsub.f32 %v347, %v358
        %v361 = vsub.f32 %v348, %v358
        %v362 = vsub.f32 %v349, %v358
        %v363 = vmul.f32 %v359, 1.442695
        %v364 = vpow.pop %v363
        %v365 = vmul.f32 %v360, 1.442695
        %v366 = vpow.pop %v365
        %v367 = vmul.f32 %v361, 1.442695
        %v368 = vpow.pop %v367
        %v369 = vmul.f32 %v362, 1.442695
        %v370 = vpow.pop %v369
        %v371 = vsel %vm351, %v364, 0.0
        %v372 = vsel %vm351, %v366, 0.0
        %v373 = vadd.f32 %v371, %v372
        %v374 = vsel %vm351, %v368, 0.0
        %v375 = vadd.f32 %v373, %v374
        %v376 = vsel %vm351, %v370, 0.0
        %v377 = vadd.f32 %v375, %v376
        %v378 = vlog2.pop %v377
        %v379 = vmul.f32 %v378, 0.6931472
        %v380 = vsub.f32 %v359, %v379
        %v381 = vsub.f32 %v360, %v379
        %v382 = vsub.f32 %v361, %v379
        %v383 = vsub.f32 %v362, %v379
        %v384 = vrcp.pop %v377
        %v385 = vmul.f32 %v364, %v384
        %v386 = vmul.f32 %v366, %v384
        %v387 = vmul.f32 %v368, %v384
        %v388 = vmul.f32 %v370, %v384
        %vm389 = vcmp.eq.s32.totalorder %v350, 0
        %vm390 = vcmp.eq.s32.totalorder %v350, 1
        %vm391 = vcmp.eq.s32.totalorder %v350, 2
        %vm392 = vcmp.eq.s32.totalorder %v350, 3
        %v393 = vsel %vm389, 1, 0
        %v394 = vsel %vm390, 1, 0
        %v395 = vsel %vm391, 1, 0
        %v396 = vsel %vm392, 1, 0
        %v397 = vcvt.s32.f32 %v393
        %v398 = vcvt.s32.f32 %v394
        %v399 = vcvt.s32.f32 %v395
        %v400 = vcvt.s32.f32 %v396
        %vm401 = vcmp.ge.s32.totalorder %v350, 0
        %v402 = vsel %vm401, 1, 0
        %v403 = vcvt.s32.f32 %v402
        %v404 = vld [vmem:[#allocation2] sm:$0x1]
        %v405 = vld [vmem:[#allocation2 + $0x1] sm:$0x1]
        %v406 = vld [vmem:[#allocation2 + $0x2] sm:$0x1]
        %v407 = vld [vmem:[#allocation2 + $0x3] sm:$0x1]
        %v408 = vsub.f32 0.0, %v380
        %v409 = vsub.f32 0.0, %v381
        %v410 = vsub.f32 0.0, %v382
        %v411 = vsub.f32 0.0, %v383
        %v412 = vmul.f32 %v397, %v408
        %v413 = vmul.f32 %v398, %v409
        %v414 = vmul.f32 %v399, %v410
        %v415 = vmul.f32 %v400, %v411
        %v416 = vsel %vm351, %v412, 0.0
        %v417 = vrot.slane %v416, 4
        %v418 = vadd.f32 %v416, %v417
        %v419 = vrot.slane %v418, 2
        %v420 = vadd.f32 %v418, %v419
        %v421 = vrot.slane %v420, 1
        %v422 = vadd.f32 %v420, %v421
        %v423 = vsel %vm351, %v413, 0.0
        %v424 = vrot.slane %v423, 4
        %v425 = vadd.f32 %v423, %v424
        %v426 = vrot.slane %v425, 2
        %v427 = vadd.f32 %v425, %v426
        %v428 = vrot.slane %v427, 1
        %v429 = vadd.f32 %v427, %v428
        %v430 = vsel %vm351, %v414, 0.0
        %v431 = vrot.slane %v430, 4
        %v432 = vadd.f32 %v430, %v431
        %v433 = vrot.slane %v432, 2
        %v434 = vadd.f32 %v432, %v433
        %v435 = vrot.slane %v434, 1
        %v436 = vadd.f32 %v434, %v435
        %v437 = vsel %vm351, %v415, 0.0
        %v438 = vrot.slane %v437, 4
        %v439 = vadd.f32 %v437, %v438
        %v440 = vrot.slane %v439, 2
        %v441 = vadd.f32 %v439, %v440
        %v442 = vrot.slane %v441, 1
        %v443 = vadd.f32 %v441, %v442
        %v444 = vadd.f32 %v404, %v422
        %v445 = vadd.f32 %v405, %v429
        %v446 = vadd.f32 %v406, %v436
        %v447 = vadd.f32 %v407, %v443
        %448 = vst [vmem:[#allocation2] sm:$0x1] %v444
        %449 = vst [vmem:[#allocation2 + $0x1] sm:$0x1] %v445
        %450 = vst [vmem:[#allocation2 + $0x2] sm:$0x1] %v446
        %451 = vst [vmem:[#allocation2 + $0x3] sm:$0x1] %v447
        %v452 = vld [vmem:[#allocation3] sm:$0x1]
        %v453 = vld [vmem:[#allocation3 + $0x1] sm:$0x1]
        %v454 = vld [vmem:[#allocation3 + $0x2] sm:$0x1]
        %v455 = vld [vmem:[#allocation3 + $0x3] sm:$0x1]
        %v456 = vmul.f32 %v397, %v385
        %v457 = vmul.f32 %v398, %v386
        %v458 = vmul.f32 %v399, %v387
        %v459 = vmul.f32 %v400, %v388
        %v460 = vsel %vm351, %v456, 0.0
        %v461 = vrot.slane %v460, 4
        %v462 = vadd.f32 %v460, %v461
        %v463 = vrot.slane %v462, 2
        %v464 = vadd.f32 %v462, %v463
        %v465 = vrot.slane %v464, 1
        %v466 = vadd.f32 %v464, %v465
        %v467 = vsel %vm351, %v457, 0.0
        %v468 = vrot.slane %v467, 4
        %v469 = vadd.f32 %v467, %v468
        %v470 = vrot.slane %v469, 2
        %v471 = vadd.f32 %v469, %v470
        %v472 = vrot.slane %v471, 1
        %v473 = vadd.f32 %v471, %v472
        %v474 = vsel %vm351, %v458, 0.0
        %v475 = vrot.slane %v474, 4
        %v476 = vadd.f32 %v474, %v475
        %v477 = vrot.slane %v476, 2
        %v478 = vadd.f32 %v476, %v477
        %v479 = vrot.slane %v478, 1
        %v480 = vadd.f32 %v478, %v479
        %v481 = vsel %vm351, %v459, 0.0
        %v482 = vrot.slane %v481, 4
        %v483 = vadd.f32 %v481, %v482
        %v484 = vrot.slane %v483, 2
        %v485 = vadd.f32 %v483, %v484
        %v486 = vrot.slane %v485, 1
        %v487 = vadd.f32 %v485, %v486
        %v488 = vadd.f32 %v452, %v466
        %v489 = vadd.f32 %v453, %v473
        %v490 = vadd.f32 %v454, %v480
        %v491 = vadd.f32 %v455, %v487
        %492 = vst [vmem:[#allocation3] sm:$0x1] %v488
        %493 = vst [vmem:[#allocation3 + $0x1] sm:$0x1] %v489
        %494 = vst [vmem:[#allocation3 + $0x2] sm:$0x1] %v490
        %495 = vst [vmem:[#allocation3 + $0x3] sm:$0x1] %v491
        %v496 = vld [vmem:[#allocation4] sm:$0x1]
        %v497 = vld [vmem:[#allocation4 + $0x1] sm:$0x1]
        %v498 = vld [vmem:[#allocation4 + $0x2] sm:$0x1]
        %v499 = vld [vmem:[#allocation4 + $0x3] sm:$0x1]
        %v500 = vmul.f32 %v385, %v403
        %v501 = vmul.f32 %v386, %v403
        %v502 = vmul.f32 %v387, %v403
        %v503 = vmul.f32 %v388, %v403
        %v504 = vsel %vm351, %v500, 0.0
        %v505 = vrot.slane %v504, 4
        %v506 = vadd.f32 %v504, %v505
        %v507 = vrot.slane %v506, 2
        %v508 = vadd.f32 %v506, %v507
        %v509 = vrot.slane %v508, 1
        %v510 = vadd.f32 %v508, %v509
        %v511 = vsel %vm351, %v501, 0.0
        %v512 = vrot.slane %v511, 4
        %v513 = vadd.f32 %v511, %v512
        %v514 = vrot.slane %v513, 2
        %v515 = vadd.f32 %v513, %v514
        %v516 = vrot.slane %v515, 1
        %v517 = vadd.f32 %v515, %v516
        %v518 = vsel %vm351, %v502, 0.0
        %v519 = vrot.slane %v518, 4
        %v520 = vadd.f32 %v518, %v519
        %v521 = vrot.slane %v520, 2
        %v522 = vadd.f32 %v520, %v521
        %v523 = vrot.slane %v522, 1
        %v524 = vadd.f32 %v522, %v523
        %v525 = vsel %vm351, %v503, 0.0
        %v526 = vrot.slane %v525, 4
        %v527 = vadd.f32 %v525, %v526
        %v528 = vrot.slane %v527, 2
        %v529 = vadd.f32 %v527, %v528
        %v530 = vrot.slane %v529, 1
        %v531 = vadd.f32 %v529, %v530
        %v532 = vadd.f32 %v496, %v510
        %v533 = vadd.f32 %v497, %v517
        %v534 = vadd.f32 %v498, %v524
        %v535 = vadd.f32 %v499, %v531
        %536 = vst [vmem:[#allocation4] sm:$0x1] %v532
        %537 = vst [vmem:[#allocation4 + $0x1] sm:$0x1] %v533
        %538 = vst [vmem:[#allocation4 + $0x2] sm:$0x1] %v534
        %539 = vst [vmem:[#allocation4 + $0x3] sm:$0x1] %v535
        %v540 = vld [vmem:[#allocation5] sm:$0x1]
        %v541 = vld [vmem:[#allocation5 + $0x1] sm:$0x1]
        %v542 = vld [vmem:[#allocation5 + $0x2] sm:$0x1]
        %v543 = vld [vmem:[#allocation5 + $0x3] sm:$0x1]
        %v544 = vsel %vm351, %v397, 0.0
        %v545 = vrot.slane %v544, 4
        %v546 = vadd.f32 %v544, %v545
        %v547 = vrot.slane %v546, 2
        %v548 = vadd.f32 %v546, %v547
        %v549 = vrot.slane %v548, 1
        %v550 = vadd.f32 %v548, %v549
        %v551 = vsel %vm351, %v398, 0.0
        %v552 = vrot.slane %v551, 4
        %v553 = vadd.f32 %v551, %v552
        %v554 = vrot.slane %v553, 2
        %v555 = vadd.f32 %v553, %v554
        %v556 = vrot.slane %v555, 1
        %v557 = vadd.f32 %v555, %v556
        %v558 = vsel %vm351, %v399, 0.0
        %v559 = vrot.slane %v558, 4
        %v560 = vadd.f32 %v558, %v559
        %v561 = vrot.slane %v560, 2
        %v562 = vadd.f32 %v560, %v561
        %v563 = vrot.slane %v562, 1
        %v564 = vadd.f32 %v562, %v563
        %v565 = vsel %vm351, %v400, 0.0
        %v566 = vrot.slane %v565, 4
        %v567 = vadd.f32 %v565, %v566
        %v568 = vrot.slane %v567, 2
        %v569 = vadd.f32 %v567, %v568
        %v570 = vrot.slane %v569, 1
        %v571 = vadd.f32 %v569, %v570
        %v572 = vadd.f32 %v540, %v550
        %v573 = vadd.f32 %v541, %v557
        %v574 = vadd.f32 %v542, %v564
        %v575 = vadd.f32 %v543, %v571
        %576 = vst [vmem:[#allocation5] sm:$0x1] %v572
        %577 = vst [vmem:[#allocation5 + $0x1] sm:$0x1] %v573
        %578 = vst [vmem:[#allocation5 + $0x2] sm:$0x1] %v574
        %579 = vst [vmem:[#allocation5 + $0x3] sm:$0x1] %v575
        // Predicated region
        $region41: #{tpu_custom_call.1} parent=27 // pred_check
          %p580 = pneg %p326
        $region42: #{tpu_custom_call.1} parent=27 // pred_check_branch
          %582 = sbr.rel (%p580) target = $region44
        $region43: #{tpu_custom_call.1} parent=27 // pred_region
          %v583 = vld [vmem:[#allocation2] sm:$0x1]
          %v584 = vld [vmem:[#allocation2 + $0x1] sm:$0x1]
          %v585 = vld [vmem:[#allocation2 + $0x2] sm:$0x1]
          %v586 = vld [vmem:[#allocation2 + $0x3] sm:$0x1]
          %587 = vst [vmem:[%s304] sm:$0x1] %v583
          %588 = vst [vmem:[%s304 + $0x1] sm:$0x1] %v584
          %589 = vst [vmem:[%s304 + $0x2] sm:$0x1] %v585
          %590 = vst [vmem:[%s304 + $0x3] sm:$0x1] %v586
          %v591 = vld [vmem:[#allocation3] sm:$0x1]
          %v592 = vld [vmem:[#allocation3 + $0x1] sm:$0x1]
          %v593 = vld [vmem:[#allocation3 + $0x2] sm:$0x1]
          %v594 = vld [vmem:[#allocation3 + $0x3] sm:$0x1]
          %595 = vst [vmem:[%s311] sm:$0x1] %v591
          %596 = vst [vmem:[%s311 + $0x1] sm:$0x1] %v592
          %597 = vst [vmem:[%s311 + $0x2] sm:$0x1] %v593
          %598 = vst [vmem:[%s311 + $0x3] sm:$0x1] %v594
          %v599 = vld [vmem:[#allocation4] sm:$0x1]
          %v600 = vld [vmem:[#allocation4 + $0x1] sm:$0x1]
          %v601 = vld [vmem:[#allocation4 + $0x2] sm:$0x1]
          %v602 = vld [vmem:[#allocation4 + $0x3] sm:$0x1]
          %603 = vst [vmem:[%s318] sm:$0x1] %v599
          %604 = vst [vmem:[%s318 + $0x1] sm:$0x1] %v600
          %605 = vst [vmem:[%s318 + $0x2] sm:$0x1] %v601
          %606 = vst [vmem:[%s318 + $0x3] sm:$0x1] %v602
          %v607 = vld [vmem:[#allocation5] sm:$0x1]
          %v608 = vld [vmem:[#allocation5 + $0x1] sm:$0x1]
          %v609 = vld [vmem:[#allocation5 + $0x2] sm:$0x1]
          %v610 = vld [vmem:[#allocation5 + $0x3] sm:$0x1]
          %611 = vst [vmem:[%s325] sm:$0x1] %v607
          %612 = vst [vmem:[%s325 + $0x1] sm:$0x1] %v608
          %613 = vst [vmem:[%s325 + $0x2] sm:$0x1] %v609
          %614 = vst [vmem:[%s325 + $0x3] sm:$0x1] %v610
        $region44: #{tpu_custom_call.1} parent=27 // pred_fallthru
          _
        %s615 = sand.u32 %s108, 1
        %s616 = scalar_lea.sflag [#allocation8], %s615
        %s617 = sand.u32 %s108, 1
        %s618 = smul.addr %s617, 4
        %s619 = scalar_lea.vmem [#allocation11], %s618
        %s620 = sand.u32 %s32, 1
        %s621 = scalar_lea.sflag [#allocation13], %s620
        %s622 = sand.u32 %s134, 1
        %s623 = smul.addr %s622, 4
        %s624 = scalar_lea.vmem [#allocation12], %s623
        %s625 = sand.u32 %s32, 1
        %s626 = scalar_lea.sflag [#allocation13], %s625
        %s627 = sand.u32 %s160, 1
        %s628 = smul.addr %s627, 4
        %s629 = scalar_lea.vmem [#allocation14], %s628
        %s630 = sand.u32 %s186, 1
        %s631 = scalar_lea.sflag [#allocation16], %s630
        %s632 = sand.u32 %s186, 1
        %s633 = smul.addr %s632, 4
        %s634 = scalar_lea.vmem [#allocation15], %s633
        // Predicated region
        $region45: #{tpu_custom_call.1} parent=27 // pred_check
          %p635 = pneg %p118
        $region46: #{tpu_custom_call.1} parent=27 // pred_check_branch
          %637 = sbr.rel (%p635) target = $region48
        $region47: #{tpu_custom_call.1} parent=27 // pred_region
          %s639 = ssub.s32 64, 64
          %640 = vsyncadd %s616, %s639
          %s641 = smul.addr %s36, 4
          %s642 = smul.addr %s641, 16
          %s643 = scalar_lea.hbm %s2, %s642
          %s644 = sshll.u32 %s619, 4
          %s645 = int_to_ptr.vmem [resolvable:$true] %s644
          %650 = dma.vmem_to_hbm [thread:$0]  %s645, 64, %s643, %s616, 16, 16, 1
        $region48: #{tpu_custom_call.1} parent=27 // pred_fallthru
          _
        // Predicated region
        $region49: #{tpu_custom_call.1} parent=27 // pred_check
          %p651 = pneg %p144
        $region50: #{tpu_custom_call.1} parent=27 // pred_check_branch
          %653 = sbr.rel (%p651) target = $region52
        $region51: #{tpu_custom_call.1} parent=27 // pred_region
          %s655 = ssub.s32 64, 64
          %656 = vsyncadd %s621, %s655
          %s657 = smul.addr %s36, 4
          %s658 = smul.addr %s657, 16
          %s659 = scalar_lea.hbm %s3, %s658
          %s660 = sshll.u32 %s624, 4
          %s661 = int_to_ptr.vmem [resolvable:$true] %s660
          %666 = dma.vmem_to_hbm [thread:$0]  %s661, 64, %s659, %s621, 16, 16, 1
        $region52: #{tpu_custom_call.1} parent=27 // pred_fallthru
          _
        // Predicated region
        $region53: #{tpu_custom_call.1} parent=27 // pred_check
          %p667 = pneg %p170
        $region54: #{tpu_custom_call.1} parent=27 // pred_check_branch
          %669 = sbr.rel (%p667) target = $region56
        $region55: #{tpu_custom_call.1} parent=27 // pred_region
          %s671 = ssub.s32 64, 64
          %672 = vsyncadd %s626, %s671
          %s673 = smul.addr %s36, 4
          %s674 = smul.addr %s673, 16
          %s675 = scalar_lea.hbm %s4, %s674
          %s676 = sshll.u32 %s629, 4
          %s677 = int_to_ptr.vmem [resolvable:$true] %s676
          %682 = dma.vmem_to_hbm [thread:$0]  %s677, 64, %s675, %s626, 16, 16, 1
        $region56: #{tpu_custom_call.1} parent=27 // pred_fallthru
          _
        // Predicated region
        $region57: #{tpu_custom_call.1} parent=27 // pred_check
          %p683 = pneg %p196
        $region58: #{tpu_custom_call.1} parent=27 // pred_check_branch
          %685 = sbr.rel (%p683) target = $region60
        $region59: #{tpu_custom_call.1} parent=27 // pred_region
          %s687 = ssub.s32 64, 64
          %688 = vsyncadd %s631, %s687
          %s689 = smul.addr %s36, 4
          %s690 = smul.addr %s689, 16
          %s691 = scalar_lea.hbm %s5, %s690
          %s692 = sshll.u32 %s634, 4
          %s693 = int_to_ptr.vmem [resolvable:$true] %s692
          %698 = dma.vmem_to_hbm [thread:$0]  %s693, 64, %s691, %s631, 16, 16, 1
        $region60: #{tpu_custom_call.1} parent=27 // pred_fallthru
          _
      $region28: #{tpu_custom_call.1} parent=5 // pred_fallthru
        _
      %p699 = scmp.le.s32.totalorder 2, %s27
      // Predicated region
      $region61: #{tpu_custom_call.1} parent=5 // pred_check
        %p700 = pneg %p699
      $region62: #{tpu_custom_call.1} parent=5 // pred_check_branch
        %702 = sbr.rel (%p700) target = $region64
      $region63: #{tpu_custom_call.1} parent=5 // pred_region
        %s703 = ssub.s32 %s27, 2
        // Predicated region
        $region65: #{tpu_custom_call.1} parent=63 // pred_check
          %p704 = pneg %p124
        $region66: #{tpu_custom_call.1} parent=63 // pred_check_branch
          %706 = sbr.rel (%p704) target = $region68
        $region67: #{tpu_custom_call.1} parent=63 // pred_region
          %s707 = sand.u32 %s109, 1
          %s708 = scalar_lea.sflag [#allocation8], %s707
          %s709 = sand.u32 %s109, 1
          %s710 = smul.addr %s709, 4
          %s711 = scalar_lea.vmem [#allocation11], %s710
          %712 = dma.done %s708, 64
        $region68: #{tpu_custom_call.1} parent=63 // pred_fallthru
          _
        // Predicated region
        $region69: #{tpu_custom_call.1} parent=63 // pred_check
          %p713 = pneg %p150
        $region70: #{tpu_custom_call.1} parent=63 // pred_check_branch
          %715 = sbr.rel (%p713) target = $region72
        $region71: #{tpu_custom_call.1} parent=63 // pred_region
          %s716 = sand.u32 %s33, 1
          %s717 = scalar_lea.sflag [#allocation13], %s716
          %s718 = sand.u32 %s135, 1
          %s719 = smul.addr %s718, 4
          %s720 = scalar_lea.vmem [#allocation12], %s719
          %721 = dma.done %s717, 64
        $region72: #{tpu_custom_call.1} parent=63 // pred_fallthru
          _
        // Predicated region
        $region73: #{tpu_custom_call.1} parent=63 // pred_check
          %p722 = pneg %p176
        $region74: #{tpu_custom_call.1} parent=63 // pred_check_branch
          %724 = sbr.rel (%p722) target = $region76
        $region75: #{tpu_custom_call.1} parent=63 // pred_region
          %s725 = sand.u32 %s33, 1
          %s726 = scalar_lea.sflag [#allocation13], %s725
          %s727 = sand.u32 %s161, 1
          %s728 = smul.addr %s727, 4
          %s729 = scalar_lea.vmem [#allocation14], %s728
          %730 = dma.done %s726, 64
        $region76: #{tpu_custom_call.1} parent=63 // pred_fallthru
          _
        // Predicated region
        $region77: #{tpu_custom_call.1} parent=63 // pred_check
          %p731 = pneg %p202
        $region78: #{tpu_custom_call.1} parent=63 // pred_check_branch
          %733 = sbr.rel (%p731) target = $region80
        $region79: #{tpu_custom_call.1} parent=63 // pred_region
          %s734 = sand.u32 %s187, 1
          %s735 = scalar_lea.sflag [#allocation16], %s734
          %s736 = sand.u32 %s187, 1
          %s737 = smul.addr %s736, 4
          %s738 = scalar_lea.vmem [#allocation15], %s737
          %739 = dma.done %s735, 64
        $region80: #{tpu_custom_call.1} parent=63 // pred_fallthru
          _
      $region64: #{tpu_custom_call.1} parent=5 // pred_fallthru
        _
    $region6: #{tpu_custom_call.1} parent=1 // loop_footer
      %s31 = sadd.s32 1, %s27
    $region7: #{tpu_custom_call.1} parent=1 // loop_footer_branch
      %26 = sbr.rel target = $region3
    $region8: #{tpu_custom_call.1} parent=1 // loop_exit
      _
    %740 = vsyncpa [#allocation7], 1
    %s741 = scalar_lea.sflag [#allocation7], 1
    %742 = vsyncpa %s741, 1
    %743 = vsyncpa [#allocation10], 1
    %s744 = scalar_lea.sflag [#allocation10], 1
    %745 = vsyncpa %s744, 1
    %746 = vsyncpa [#allocation8], 1
    %s747 = scalar_lea.sflag [#allocation8], 1
    %748 = vsyncpa %s747, 1
    %749 = vsyncpa [#allocation13], 1
    %s750 = scalar_lea.sflag [#allocation13], 1
    %751 = vsyncpa %s750, 1
    %752 = vsyncpa [#allocation16], 1
    %s753 = scalar_lea.sflag [#allocation16], 1
    %754 = vsyncpa %s753, 1

</llo_original>
